<compile_context>
chip_gen: v6e
topology: v6e:2x2x1
jax: 0.10.0
libtpu: 0.0.40
codegen_flags: <defaults>
</compile_context>

<pallas_src>
import functools

import jax
import jax.numpy as jnp
from jax.experimental import pallas as pl
from jax.experimental.pallas import tpu as pltpu


# ----------------------------------------------------------------------------
# Kernels (pure VPU elementwise; scalars baked as Python floats -> no SMEM).
# ----------------------------------------------------------------------------
def _blend_kernel(x1_ref, x2_ref, o_ref, *, p: float):
    """Eval-mode blend: o = (1 - p) * x1 + p * x2."""
    w1 = 1.0 - p  # hoisted Python constant, folded at trace time
    o_ref[...] = w1 * x1_ref[...] + p * x2_ref[...]


def _copy_kernel(x_ref, o_ref):
    """Degenerate blend (p == 0 or p == 1): o = x (single HBM input stream)."""
    o_ref[...] = x_ref[...]


# ----------------------------------------------------------------------------
# Layout helpers.
# ----------------------------------------------------------------------------
def _round_up(n: int, m: int) -> int:
    return ((n + m - 1) // m) * m


def _pick_layout(total: int, itemsize: int):
    """Choose (lane_width, rows, block_rows) for a flattened elementwise op."""
    sub = max(8, 32 // itemsize)  # sublane multiple: 8 f32, 16 bf16, 32 int8

    lane = None
    for cand in (2048, 1024, 512, 256, 128):  # lane-dense, prefer wide
        if total % cand == 0 and (total // cand) >= sub:
            lane = cand
            break
    if lane is None:
        # No exact fit: fall back to minimal padding at lane = 128.
        lane = 128
        rows = max(sub, _round_up(pl.cdiv(total, lane), sub))
    else:
        rows = total // lane

    # Block rows targeting ~2 MiB per stream buffer (roofline-sized tiles,
    # conservative enough for v7x's 64 MiB VMEM / v5e's 16 MiB scoped default).
    target_rows = max(sub, (2 * 1024 * 1024) // (lane * itemsize))
    tm = max(sub, (min(target_rows, rows) // sub) * sub)

    # Megacore: give the parallel grid axis >= 2 steps when there is work to
    # split, so both v7x TensorCores contribute HBM bandwidth.
    if pl.cdiv(rows, tm) == 1 and rows > sub:
        tm = max(sub, _round_up(pl.cdiv(rows, 2), sub))

    return lane, rows, tm


def _flatten_pad(x: jax.Array, lane: int, rows: int) -> jax.Array:
    """Flatten to (rows, lane); pad (single extra copy) only if required."""
    flat = x.reshape(-1)
    padded = rows * lane
    if padded != flat.size:
        flat = jnp.pad(flat, (0, padded - flat.size))
    return flat.reshape(rows, lane)


# ----------------------------------------------------------------------------
# Public entry points.
# ----------------------------------------------------------------------------
def sg_eval_blend(x1: jax.Array, x2: jax.Array, p: float, *,
                  force_kernel: bool = False) -> jax.Array:
    """General eval-mode StochasticGate blend: (1 - p) * x1 + p * x2."""
    assert x1.shape == x2.shape, "x1/x2 shapes must match"
    assert x1.dtype == x2.dtype, "x1/x2 dtypes must match"
    p = float(p)

    # Fastest path: degenerate blends need no kernel and no HBM traffic.
    if p == 0.0 and not force_kernel:
        return x1
    if p == 1.0 and not force_kernel:
        return x2

    total = x1.size
    itemsize = jnp.dtype(x1.dtype).itemsize
    lane, rows, tm = _pick_layout(total, itemsize)

    if p == 0.0:
        inputs = (x1,)            # drop the x2 HBM stream entirely
        kernel = _copy_kernel
    elif p == 1.0:
        inputs = (x2,)            # drop the x1 HBM stream entirely
        kernel = _copy_kernel
    else:
        inputs = (x1, x2)
        kernel = functools.partial(_blend_kernel, p=p)

    flat_inputs = [_flatten_pad(a, lane, rows) for a in inputs]

    spec = pl.BlockSpec((tm, lane), lambda i: (i, 0))
    tile_bytes = tm * lane * itemsize
    n_streams = len(flat_inputs) + 1  # inputs + output
    vmem_limit = max(16 * 1024 * 1024,
                     n_streams * 2 * tile_bytes + 4 * 1024 * 1024)

    out2d = pl.pallas_call(
        kernel,
        out_shape=jax.ShapeDtypeStruct((rows, lane), x1.dtype),
        grid=(pl.cdiv(rows, tm),),
        in_specs=[spec] * len(flat_inputs),
        out_specs=spec,
        compiler_params=pltpu.CompilerParams(
            dimension_semantics=("parallel",),
            vmem_limit_bytes=int(vmem_limit),
        ),
    )(*flat_inputs)

    out_flat = out2d.reshape(-1)
    if out_flat.size != total:
        out_flat = out_flat[:total]
    return out_flat.reshape(x1.shape)


def stochastic_gate(x1: jax.Array, x2: jax.Array, p: float = 0.0) -> jax.Array:
    """Faithful StochasticGate.forward: the module overwrites p = 0, so the
    output is exactly x1 in both training and eval mode."""
    del p  # forward() sets self.p = 0 unconditionally
    return sg_eval_blend(x1, x2, 0.0)


# ----------------------------------------------------------------------------
# Demo / self-test.
# ----------------------------------------------------------------------------
if __name__ == "__main__":
    key = jax.random.PRNGKey(0)
    k1, k2, k3, k4 = jax.random.split(key, 4)

    # x1: shallow feature, x2: deep feature (NCHW, small demo shape).
    x1 = jax.random.normal(k1, (2, 4, 16, 16), dtype=jnp.float32)
    x2 = jax.random.normal(k2, (2, 4, 16, 16), dtype=jnp.float32)

    # 1) Module-faithful path (p forced to 0): short-circuit, output == x1.
    out_mod = jax.block_until_ready(stochastic_gate(x1, x2))
    assert out_mod.shape == x1.shape and out_mod.dtype == x1.dtype
    assert jnp.array_equal(out_mod, x1)

    # 2) Same semantics forced through the Pallas kernel (single-stream copy).
    out_k0 = jax.block_until_ready(sg_eval_blend(x1, x2, 0.0, force_kernel=True))
    assert out_k0.shape == x1.shape and out_k0.dtype == x1.dtype
    assert jnp.allclose(out_k0, x1, atol=0.0, rtol=0.0)

    # 3) General eval-mode blend with p > 0 (two-stream kernel).
    p = 0.3
    out_kp = jax.block_until_ready(sg_eval_blend(x1, x2, p))
    ref = (1.0 - p) * x1 + p * x2
    assert jnp.allclose(out_kp, ref, atol=1e-6, rtol=1e-6)

    # 4) Robustness: spatial dims that are not multiples of 128 (H = W = 7).
    y1 = jax.random.normal(k3, (2, 3, 7, 7), dtype=jnp.float32)
    y2 = jax.random.normal(k4, (2, 3, 7, 7), dtype=jnp.float32)
    out_y = jax.block_until_ready(sg_eval_blend(y1, y2, p))
    ref_y = (1.0 - p) * y1 + p * y2
    assert jnp.allclose(out_y, ref_y, atol=1e-6, rtol=1e-6)

    print("KERNEL_OK")
</pallas_src>

<mosaic_0001>
module attributes {stable_mosaic.version = 11 : i64} {
  func.func @_copy_kernel(%arg0: i32, %arg1: memref<8x256xf32, #tpu.memory_space<vmem>>, %arg2: memref<8x256xf32, #tpu.memory_space<vmem>>) attributes {dimension_semantics = [#tpu.dimension_semantics<parallel>], iteration_bounds = array<i64: 1>, scalar_prefetch = 0 : i64, scratch_operands = 0 : i64, tpu.core_type = #tpu.core_type<tc>, window_params = [{transform_indices = @transform_0, window_bounds = array<i64: 8, 256>}, {transform_indices = @transform_1, window_bounds = array<i64: 8, 256>}]} {
    %c0 = arith.constant 0 : index
    %c0_0 = arith.constant 0 : index
    %0 = vector.load %arg1[%c0, %c0_0] : memref<8x256xf32, #tpu.memory_space<vmem>>, vector<8x256xf32>
    %c0_1 = arith.constant 0 : index
    %c0_2 = arith.constant 0 : index
    %1 = vector.load %arg2[%c0_1, %c0_2] : memref<8x256xf32, #tpu.memory_space<vmem>>, vector<8x256xf32>
    tpu.vector_store %arg2[%c0_1, %c0_2], %0 {strides = array<i32>} : memref<8x256xf32, #tpu.memory_space<vmem>>, vector<8x256xf32>,
    return
  }
  func.func @transform_0(%arg0: i32) -> (i32, i32) {
    %c0_i32 = arith.constant 0 : i32
    %c0_i32_0 = arith.constant 0 : i32
    return %arg0, %c0_i32 : i32, i32
  }
  func.func @transform_1(%arg0: i32) -> (i32, i32) {
    %c0_i32 = arith.constant 0 : i32
    %c0_i32_0 = arith.constant 0 : i32
    return %arg0, %c0_i32 : i32, i32
  }
}

</mosaic_0001>

<llo_original>
// kernel: tpu_custom_call.1
$region0: #{tpu_custom_call.1}
  #allocation0 [shape = 'u32[]', space=smem, size = 0x4, offset = 0x4, fixed_abs, tag = 'smem constant byte address 0x4 - core index']
  #allocation1 [shape = 'u32[144,128]{1,0:T(1,128)}', space=vmem, size = 0x12000, scoped, tag = 'internal scratch']
  %s0 = inlined_call_operand.hbm [shape: f32[8,256], index: 0, kind: input, shape index: {}]
  %s1 = inlined_call_operand.hbm [shape: f32[8,256], index: 1, kind: output, shape index: {}]
  %s2 = sld [smem:[#allocation0]]
  $region18: #{tpu_custom_call.1} parent=0
    _
  %s4 = ssub.s32 1, %s2
  %s5 = scalar_select 0, %s4, %s2
  $region1: #{tpu_custom_call.1} parent=0
    #allocation2 [shape = 'u8[8192]{0}', space=vmem, size = 0x2000, scoped, tag = 'input window, operand 0, single buffered']
    #allocation3 [shape = 's32[1]{0}', space=sflag, size = 0x4, scoped, tag = 'scoped memory for tpu_custom_call.1']
    #allocation4 [shape = 's32[1]{0}', space=sflag, size = 0x4, scoped, tag = 'scoped memory for tpu_custom_call.1']
    #allocation5 [shape = 'u8[8192]{0}', space=vmem, size = 0x2000, scoped, tag = 'output window, operand 0, single buffered']
    %6 = vsyncpa [#allocation3], 0
    %7 = vsyncpa [#allocation4], 0
    // Predicated region
    $region2: #{tpu_custom_call.1} parent=1 // pred_check
      _
    $region3: #{tpu_custom_call.1} parent=1 // pred_check_branch
      %9 = sbr.rel (0) target = $region5
    $region4: #{tpu_custom_call.1} parent=1 // pred_region
      %s11 = ssub.s32 256, 256
      %12 = vsyncadd [#allocation3], %s11
      %s14 = sshll.u32 [#allocation2], 4
      %s15 = int_to_ptr.vmem [resolvable:$true] %s14
      %17 = dma.hbm_to_vmem [thread:$0]  %s0, 256, %s15, [#allocation3]
    $region5: #{tpu_custom_call.1} parent=1 // pred_fallthru
      _
    // Predicated region
    $region6: #{tpu_custom_call.1} parent=1 // pred_check
      _
    $region7: #{tpu_custom_call.1} parent=1 // pred_check_branch
      %19 = sbr.rel (0) target = $region9
    $region8: #{tpu_custom_call.1} parent=1 // pred_region
      %20 = dma.done [#allocation3], 256
    $region9: #{tpu_custom_call.1} parent=1 // pred_fallthru
      _
    %v21 = vld [vmem:[#allocation2] sm:$0xff]
    %v22 = vld [vmem:[#allocation2 + $0x8] sm:$0xff]
    %23 = vst [vmem:[#allocation5] sm:$0xff] %v21
    %24 = vst [vmem:[#allocation5 + $0x8] sm:$0xff] %v22
    // Predicated region
    $region10: #{tpu_custom_call.1} parent=1 // pred_check
      _
    $region11: #{tpu_custom_call.1} parent=1 // pred_check_branch
      %26 = sbr.rel (0) target = $region13
    $region12: #{tpu_custom_call.1} parent=1 // pred_region
      %s28 = ssub.s32 256, 256
      %29 = vsyncadd [#allocation4], %s28
      %s31 = sshll.u32 [#allocation5], 4
      %s32 = int_to_ptr.vmem [resolvable:$true] %s31
      %34 = dma.vmem_to_hbm [thread:$0]  %s32, 256, %s1, [#allocation4]
    $region13: #{tpu_custom_call.1} parent=1 // pred_fallthru
      _
    // Predicated region
    $region14: #{tpu_custom_call.1} parent=1 // pred_check
      _
    $region15: #{tpu_custom_call.1} parent=1 // pred_check_branch
      %36 = sbr.rel (0) target = $region17
    $region16: #{tpu_custom_call.1} parent=1 // pred_region
      %37 = dma.done [#allocation4], 256
    $region17: #{tpu_custom_call.1} parent=1 // pred_fallthru
      _
    %38 = vsyncpa [#allocation3], 1
    %39 = vsyncpa [#allocation4], 1

</llo_original>
